<compile_context>
chip_gen: v6e
topology: v6e:2x2x1
jax: 0.10.0
libtpu: 0.0.40
codegen_flags: <defaults>
</compile_context>

<pallas_src>
import functools

import jax
import jax.numpy as jnp
from jax import lax
from jax.experimental import pallas as pl
from jax.experimental.pallas import tpu as pltpu


def _round_up(x, m):
    return (x + m - 1) // m * m


def _want_grid_steps():
    """2 parallel grid steps on 2-TensorCore chips (v7x); 1 on v5e/v6e."""
    try:
        kind = jax.devices()[0].device_kind.lower()
    except Exception:
        return 1
    return 2 if "v7" in kind else 1


def _choose_tiling(B, bytes_per_elem, want_steps):
    """Pick (batch_tile, steps): the fewest grid steps >= want_steps whose
    batch tile fits a conservative double-buffered VMEM budget."""
    budget = 12 << 20                    # stay under v5e's ~16 MiB scoped VMEM
    cap = max(1, budget // (2 * bytes_per_elem))
    for steps in range(1, B + 1):
        if B % steps:
            continue
        bt = B // steps
        if steps >= want_steps and bt <= cap:
            return bt, steps
    return 1, B


def _corr_up_kernel(x_ref, z_ref, o_ref, *, Hz, Wz, Wx, Lp, Pg):
    # x_ref: (Bt, C, P)   search features, flat spatial on lanes (free reshape)
    # z_ref: (Bt, Q, C)   template features, Q = Hz*Wz
    # o_ref: (Bt, 1, Lp)  lane-dense flat correlation rows (cropped in wrapper)
    Bt, _, P = x_ref.shape
    Q = z_ref.shape[1]

    def one_batch(i, carry):
        z = z_ref[i]                                              # (Q, C)
        x = x_ref[i]                                              # (C, P)
        # One MXU contraction over channels: g[q, p] = sum_c z[q, c] * x[c, p]
        g = jnp.dot(z, x, preferred_element_type=jnp.float32)     # (Q, P)
        # Zero lane headroom so every shifted slice below stays in bounds and
        # the (cropped) tail columns of the output remain finite.
        if Pg > P:
            g = jnp.concatenate(
                [g, jnp.zeros((Q, Pg - P), jnp.float32)], axis=1)  # (Q, Pg)
        # Correlation = sum over template positions (u, v) of statically
        # shifted lane-slices of g; balanced tree keeps the add chain short.
        terms = []
        for u in range(Hz):
            for v in range(Wz):
                q = u * Wz + v
                s = u * Wx + v
                terms.append(g[q:q + 1, s:s + Lp])
        while len(terms) > 1:
            nxt = [terms[k] + terms[k + 1]
                   for k in range(0, len(terms) - 1, 2)]
            if len(terms) % 2:
                nxt.append(terms[-1])
            terms = nxt
        o_ref[i] = (0.1 * terms[0]).astype(o_ref.dtype)
        return carry

    lax.fori_loop(0, Bt, one_batch, None, unroll=True)


def corr_up(z_f, x_f):
    """Pallas implementation of Corr_Up.forward (training branch)."""
    B, C, Hz, Wz = z_f.shape
    Bx, Cx, Hx, Wx = x_f.shape
    assert B == Bx and C == Cx and Hz <= Hx and Wz <= Wx
    Ho, Wo = Hx - Hz + 1, Wx - Wz + 1
    P = Hx * Wx                          # flattened search positions
    Q = Hz * Wz                          # flattened template positions
    L = Ho * Wx                          # valid flat output length per element
    Lp = _round_up(L, 128)               # lane-dense output row width
    max_shift = (Hz - 1) * Wx + (Wz - 1)
    Pg = _round_up(Lp + max_shift, 128)  # g width incl. in-kernel zero headroom

    # X: metadata-only reshape (no HBM copy). Z is tiny, transpose it in XLA.
    x2 = x_f.reshape(B, C, P)
    z2 = jnp.transpose(z_f, (0, 2, 3, 1)).reshape(B, Q, C)

    itemsize = jnp.dtype(x_f.dtype).itemsize
    bytes_per_elem = (C * P + Q * C + Lp) * itemsize
    Bt, steps = _choose_tiling(B, bytes_per_elem, _want_grid_steps())

    kernel = functools.partial(
        _corr_up_kernel, Hz=Hz, Wz=Wz, Wx=Wx, Lp=Lp, Pg=Pg)

    out_flat = pl.pallas_call(
        kernel,
        out_shape=jax.ShapeDtypeStruct((B, 1, Lp), x_f.dtype),
        grid_spec=pltpu.PrefetchScalarGridSpec(
            num_scalar_prefetch=0,
            grid=(steps,),
            in_specs=[
                pl.BlockSpec((Bt, C, P), lambda b: (b, 0, 0)),
                pl.BlockSpec((Bt, Q, C), lambda b: (b, 0, 0)),
            ],
            out_specs=pl.BlockSpec((Bt, 1, Lp), lambda b: (b, 0, 0)),
        ),
        compiler_params=pltpu.CompilerParams(
            dimension_semantics=("parallel",)),
        cost_estimate=pl.CostEstimate(
            flops=2 * B * Q * C * P + B * Q * Lp,
            transcendentals=0,
            bytes_accessed=(B * C * P + B * Q * C + B * Lp) * itemsize),
    )(x2, z2)

    # Crop the flat (Ho, Wx)-row map to (Ho, Wo), restore NCHW (B, 1, Ho, Wo).
    out = out_flat[:, 0, :L].reshape(B, Ho, Wx)[:, :, :Wo]
    return out[:, None, :, :]


def corr_up_reference(z_f, x_f):
    """Pure-JAX reference matching PyTorch's grouped F.conv2d semantics."""
    B = z_f.shape[0]
    outs = []
    for b in range(B):
        o = jax.lax.conv_general_dilated(
            x_f[b:b + 1], z_f[b:b + 1],
            window_strides=(1, 1), padding="VALID",
            dimension_numbers=("NCHW", "OIHW", "NCHW"))
        outs.append(o)
    return 0.1 * jnp.concatenate(outs, axis=0)


if __name__ == "__main__":
    key = jax.random.PRNGKey(0)
    kx, kz = jax.random.split(key)

    B, C = 2, 4
    Hx = Wx = 16          # search-region feature map
    Hz = Wz = 6           # template feature map
    x_f = jax.random.normal(kx, (B, C, Hx, Wx), dtype=jnp.float32)
    z_f = jax.random.normal(kz, (B, C, Hz, Wz), dtype=jnp.float32)

    out = corr_up(z_f, x_f)
    out = jax.block_until_ready(out)

    ref = jax.block_until_ready(corr_up_reference(z_f, x_f))
    assert out.shape == (B, 1, Hx - Hz + 1, Wx - Wz + 1)
    assert jnp.allclose(out, ref, atol=1e-4, rtol=1e-4)

    print("KERNEL_OK")
</pallas_src>

<mosaic_0001>
module attributes {stable_mosaic.version = 11 : i64} {
  func.func @_corr_up_kernel(%arg0: i32, %arg1: memref<2x4x256xf32, #tpu.memory_space<vmem>>, %arg2: memref<2x36x4xf32, #tpu.memory_space<vmem>>, %arg3: memref<2x1x256xf32, #tpu.memory_space<vmem>>) attributes {dimension_semantics = [#tpu.dimension_semantics<parallel>], iteration_bounds = array<i64: 1>, scalar_prefetch = 0 : i64, scratch_operands = 0 : i64, tpu.core_type = #tpu.core_type<tc>, window_params = [{transform_indices = @transform_0, window_bounds = array<i64: 2, 4, 256>}, {transform_indices = @transform_1, window_bounds = array<i64: 2, 36, 4>}, {transform_indices = @transform_2, window_bounds = array<i64: 2, 1, 256>}]} {
    %c0_i32 = arith.constant 0 : i32
    %0 = arith.index_cast %c0_i32 : i32 to index
    %c0 = arith.constant 0 : index
    %c0_0 = arith.constant 0 : index
    %1 = vector.load %arg2[%0, %c0, %c0_0] : memref<2x36x4xf32, #tpu.memory_space<vmem>>, vector<1x36x4xf32>
    %2 = vector.shape_cast %1 : vector<1x36x4xf32> to vector<36x4xf32>
    %3 = arith.index_cast %c0_i32 : i32 to index
    %c0_1 = arith.constant 0 : index
    %c0_2 = arith.constant 0 : index
    %4 = vector.load %arg1[%3, %c0_1, %c0_2] : memref<2x4x256xf32, #tpu.memory_space<vmem>>, vector<1x4x256xf32>
    %5 = vector.shape_cast %4 : vector<1x4x256xf32> to vector<4x256xf32>
    %cst = arith.constant dense<0.000000e+00> : vector<36x256xf32>
    %6 = tpu.matmul %2, %5, %cst {dimension_numbers = #tpu.dot_dimension_numbers<[1], [0], [0], [1], [0, 0, 1, 1], [], []>} : vector<36x4xf32>, vector<4x256xf32>, vector<36x256xf32> -> vector<36x256xf32>
    %cst_3 = arith.constant 0.000000e+00 : f32
    %7 = vector.broadcast %cst_3 : f32 to vector<36x128xf32>
    %8 = tpu.concatenate %6, %7 in 1 : vector<36x256xf32>, vector<36x128xf32> -> vector<36x384xf32>
    %9 = vector.extract_strided_slice %8 {offsets = [0, 0], sizes = [1, 256], strides = [1, 1]} : vector<36x384xf32> to vector<1x256xf32>
    %10 = vector.extract_strided_slice %8 {offsets = [1, 1], sizes = [1, 256], strides = [1, 1]} : vector<36x384xf32> to vector<1x256xf32>
    %11 = vector.extract_strided_slice %8 {offsets = [2, 2], sizes = [1, 256], strides = [1, 1]} : vector<36x384xf32> to vector<1x256xf32>
    %12 = vector.extract_strided_slice %8 {offsets = [3, 3], sizes = [1, 256], strides = [1, 1]} : vector<36x384xf32> to vector<1x256xf32>
    %13 = vector.extract_strided_slice %8 {offsets = [4, 4], sizes = [1, 256], strides = [1, 1]} : vector<36x384xf32> to vector<1x256xf32>
    %14 = vector.extract_strided_slice %8 {offsets = [5, 5], sizes = [1, 256], strides = [1, 1]} : vector<36x384xf32> to vector<1x256xf32>
    %15 = vector.extract_strided_slice %8 {offsets = [6, 16], sizes = [1, 256], strides = [1, 1]} : vector<36x384xf32> to vector<1x256xf32>
    %16 = vector.extract_strided_slice %8 {offsets = [7, 17], sizes = [1, 256], strides = [1, 1]} : vector<36x384xf32> to vector<1x256xf32>
    %17 = vector.extract_strided_slice %8 {offsets = [8, 18], sizes = [1, 256], strides = [1, 1]} : vector<36x384xf32> to vector<1x256xf32>
    %18 = vector.extract_strided_slice %8 {offsets = [9, 19], sizes = [1, 256], strides = [1, 1]} : vector<36x384xf32> to vector<1x256xf32>
    %19 = vector.extract_strided_slice %8 {offsets = [10, 20], sizes = [1, 256], strides = [1, 1]} : vector<36x384xf32> to vector<1x256xf32>
    %20 = vector.extract_strided_slice %8 {offsets = [11, 21], sizes = [1, 256], strides = [1, 1]} : vector<36x384xf32> to vector<1x256xf32>
    %21 = vector.extract_strided_slice %8 {offsets = [12, 32], sizes = [1, 256], strides = [1, 1]} : vector<36x384xf32> to vector<1x256xf32>
    %22 = vector.extract_strided_slice %8 {offsets = [13, 33], sizes = [1, 256], strides = [1, 1]} : vector<36x384xf32> to vector<1x256xf32>
    %23 = vector.extract_strided_slice %8 {offsets = [14, 34], sizes = [1, 256], strides = [1, 1]} : vector<36x384xf32> to vector<1x256xf32>
    %24 = vector.extract_strided_slice %8 {offsets = [15, 35], sizes = [1, 256], strides = [1, 1]} : vector<36x384xf32> to vector<1x256xf32>
    %25 = vector.extract_strided_slice %8 {offsets = [16, 36], sizes = [1, 256], strides = [1, 1]} : vector<36x384xf32> to vector<1x256xf32>
    %26 = vector.extract_strided_slice %8 {offsets = [17, 37], sizes = [1, 256], strides = [1, 1]} : vector<36x384xf32> to vector<1x256xf32>
    %27 = vector.extract_strided_slice %8 {offsets = [18, 48], sizes = [1, 256], strides = [1, 1]} : vector<36x384xf32> to vector<1x256xf32>
    %28 = vector.extract_strided_slice %8 {offsets = [19, 49], sizes = [1, 256], strides = [1, 1]} : vector<36x384xf32> to vector<1x256xf32>
    %29 = vector.extract_strided_slice %8 {offsets = [20, 50], sizes = [1, 256], strides = [1, 1]} : vector<36x384xf32> to vector<1x256xf32>
    %30 = vector.extract_strided_slice %8 {offsets = [21, 51], sizes = [1, 256], strides = [1, 1]} : vector<36x384xf32> to vector<1x256xf32>
    %31 = vector.extract_strided_slice %8 {offsets = [22, 52], sizes = [1, 256], strides = [1, 1]} : vector<36x384xf32> to vector<1x256xf32>
    %32 = vector.extract_strided_slice %8 {offsets = [23, 53], sizes = [1, 256], strides = [1, 1]} : vector<36x384xf32> to vector<1x256xf32>
    %33 = vector.extract_strided_slice %8 {offsets = [24, 64], sizes = [1, 256], strides = [1, 1]} : vector<36x384xf32> to vector<1x256xf32>
    %34 = vector.extract_strided_slice %8 {offsets = [25, 65], sizes = [1, 256], strides = [1, 1]} : vector<36x384xf32> to vector<1x256xf32>
    %35 = vector.extract_strided_slice %8 {offsets = [26, 66], sizes = [1, 256], strides = [1, 1]} : vector<36x384xf32> to vector<1x256xf32>
    %36 = vector.extract_strided_slice %8 {offsets = [27, 67], sizes = [1, 256], strides = [1, 1]} : vector<36x384xf32> to vector<1x256xf32>
    %37 = vector.extract_strided_slice %8 {offsets = [28, 68], sizes = [1, 256], strides = [1, 1]} : vector<36x384xf32> to vector<1x256xf32>
    %38 = vector.extract_strided_slice %8 {offsets = [29, 69], sizes = [1, 256], strides = [1, 1]} : vector<36x384xf32> to vector<1x256xf32>
    %39 = vector.extract_strided_slice %8 {offsets = [30, 80], sizes = [1, 256], strides = [1, 1]} : vector<36x384xf32> to vector<1x256xf32>
    %40 = vector.extract_strided_slice %8 {offsets = [31, 81], sizes = [1, 256], strides = [1, 1]} : vector<36x384xf32> to vector<1x256xf32>
    %41 = vector.extract_strided_slice %8 {offsets = [32, 82], sizes = [1, 256], strides = [1, 1]} : vector<36x384xf32> to vector<1x256xf32>
    %42 = vector.extract_strided_slice %8 {offsets = [33, 83], sizes = [1, 256], strides = [1, 1]} : vector<36x384xf32> to vector<1x256xf32>
    %43 = vector.extract_strided_slice %8 {offsets = [34, 84], sizes = [1, 256], strides = [1, 1]} : vector<36x384xf32> to vector<1x256xf32>
    %44 = vector.extract_strided_slice %8 {offsets = [35, 85], sizes = [1, 256], strides = [1, 1]} : vector<36x384xf32> to vector<1x256xf32>
    %45 = arith.addf %9, %10 : vector<1x256xf32>
    %46 = arith.addf %11, %12 : vector<1x256xf32>
    %47 = arith.addf %13, %14 : vector<1x256xf32>
    %48 = arith.addf %15, %16 : vector<1x256xf32>
    %49 = arith.addf %17, %18 : vector<1x256xf32>
    %50 = arith.addf %19, %20 : vector<1x256xf32>
    %51 = arith.addf %21, %22 : vector<1x256xf32>
    %52 = arith.addf %23, %24 : vector<1x256xf32>
    %53 = arith.addf %25, %26 : vector<1x256xf32>
    %54 = arith.addf %27, %28 : vector<1x256xf32>
    %55 = arith.addf %29, %30 : vector<1x256xf32>
    %56 = arith.addf %31, %32 : vector<1x256xf32>
    %57 = arith.addf %33, %34 : vector<1x256xf32>
    %58 = arith.addf %35, %36 : vector<1x256xf32>
    %59 = arith.addf %37, %38 : vector<1x256xf32>
    %60 = arith.addf %39, %40 : vector<1x256xf32>
    %61 = arith.addf %41, %42 : vector<1x256xf32>
    %62 = arith.addf %43, %44 : vector<1x256xf32>
    %63 = arith.addf %45, %46 : vector<1x256xf32>
    %64 = arith.addf %47, %48 : vector<1x256xf32>
    %65 = arith.addf %49, %50 : vector<1x256xf32>
    %66 = arith.addf %51, %52 : vector<1x256xf32>
    %67 = arith.addf %53, %54 : vector<1x256xf32>
    %68 = arith.addf %55, %56 : vector<1x256xf32>
    %69 = arith.addf %57, %58 : vector<1x256xf32>
    %70 = arith.addf %59, %60 : vector<1x256xf32>
    %71 = arith.addf %61, %62 : vector<1x256xf32>
    %72 = arith.addf %63, %64 : vector<1x256xf32>
    %73 = arith.addf %65, %66 : vector<1x256xf32>
    %74 = arith.addf %67, %68 : vector<1x256xf32>
    %75 = arith.addf %69, %70 : vector<1x256xf32>
    %76 = arith.addf %72, %73 : vector<1x256xf32>
    %77 = arith.addf %74, %75 : vector<1x256xf32>
    %78 = arith.addf %76, %77 : vector<1x256xf32>
    %79 = arith.addf %78, %71 : vector<1x256xf32>
    %cst_4 = arith.constant 1.000000e-01 : f32
    %80 = vector.broadcast %cst_4 : f32 to vector<1x256xf32>
    %81 = arith.mulf %80, %79 : vector<1x256xf32>
    %82 = arith.index_cast %c0_i32 : i32 to index
    %c0_5 = arith.constant 0 : index
    %c0_6 = arith.constant 0 : index
    %83 = vector.load %arg3[%82, %c0_5, %c0_6] : memref<2x1x256xf32, #tpu.memory_space<vmem>>, vector<1x1x256xf32>
    %84 = vector.shape_cast %83 : vector<1x1x256xf32> to vector<1x256xf32>
    %85 = vector.shape_cast %81 : vector<1x256xf32> to vector<1x1x256xf32>
    tpu.vector_store %arg3[%82, %c0_5, %c0_6], %85 {strides = array<i32>} : memref<2x1x256xf32, #tpu.memory_space<vmem>>, vector<1x1x256xf32>,
    %c1_i32 = arith.constant 1 : i32
    %86 = arith.index_cast %c1_i32 : i32 to index
    %c0_7 = arith.constant 0 : index
    %c0_8 = arith.constant 0 : index
    %87 = vector.load %arg2[%86, %c0_7, %c0_8] : memref<2x36x4xf32, #tpu.memory_space<vmem>>, vector<1x36x4xf32>
    %88 = vector.shape_cast %87 : vector<1x36x4xf32> to vector<36x4xf32>
    %89 = arith.index_cast %c1_i32 : i32 to index
    %c0_9 = arith.constant 0 : index
    %c0_10 = arith.constant 0 : index
    %90 = vector.load %arg1[%89, %c0_9, %c0_10] : memref<2x4x256xf32, #tpu.memory_space<vmem>>, vector<1x4x256xf32>
    %91 = vector.shape_cast %90 : vector<1x4x256xf32> to vector<4x256xf32>
    %cst_11 = arith.constant dense<0.000000e+00> : vector<36x256xf32>
    %92 = tpu.matmul %88, %91, %cst_11 {dimension_numbers = #tpu.dot_dimension_numbers<[1], [0], [0], [1], [0, 0, 1, 1], [], []>} : vector<36x4xf32>, vector<4x256xf32>, vector<36x256xf32> -> vector<36x256xf32>
    %cst_12 = arith.constant 0.000000e+00 : f32
    %93 = vector.broadcast %cst_12 : f32 to vector<36x128xf32>
    %94 = tpu.concatenate %92, %93 in 1 : vector<36x256xf32>, vector<36x128xf32> -> vector<36x384xf32>
    %95 = vector.extract_strided_slice %94 {offsets = [0, 0], sizes = [1, 256], strides = [1, 1]} : vector<36x384xf32> to vector<1x256xf32>
    %96 = vector.extract_strided_slice %94 {offsets = [1, 1], sizes = [1, 256], strides = [1, 1]} : vector<36x384xf32> to vector<1x256xf32>
    %97 = vector.extract_strided_slice %94 {offsets = [2, 2], sizes = [1, 256], strides = [1, 1]} : vector<36x384xf32> to vector<1x256xf32>
    %98 = vector.extract_strided_slice %94 {offsets = [3, 3], sizes = [1, 256], strides = [1, 1]} : vector<36x384xf32> to vector<1x256xf32>
    %99 = vector.extract_strided_slice %94 {offsets = [4, 4], sizes = [1, 256], strides = [1, 1]} : vector<36x384xf32> to vector<1x256xf32>
    %100 = vector.extract_strided_slice %94 {offsets = [5, 5], sizes = [1, 256], strides = [1, 1]} : vector<36x384xf32> to vector<1x256xf32>
    %101 = vector.extract_strided_slice %94 {offsets = [6, 16], sizes = [1, 256], strides = [1, 1]} : vector<36x384xf32> to vector<1x256xf32>
    %102 = vector.extract_strided_slice %94 {offsets = [7, 17], sizes = [1, 256], strides = [1, 1]} : vector<36x384xf32> to vector<1x256xf32>
    %103 = vector.extract_strided_slice %94 {offsets = [8, 18], sizes = [1, 256], strides = [1, 1]} : vector<36x384xf32> to vector<1x256xf32>
    %104 = vector.extract_strided_slice %94 {offsets = [9, 19], sizes = [1, 256], strides = [1, 1]} : vector<36x384xf32> to vector<1x256xf32>
    %105 = vector.extract_strided_slice %94 {offsets = [10, 20], sizes = [1, 256], strides = [1, 1]} : vector<36x384xf32> to vector<1x256xf32>
    %106 = vector.extract_strided_slice %94 {offsets = [11, 21], sizes = [1, 256], strides = [1, 1]} : vector<36x384xf32> to vector<1x256xf32>
    %107 = vector.extract_strided_slice %94 {offsets = [12, 32], sizes = [1, 256], strides = [1, 1]} : vector<36x384xf32> to vector<1x256xf32>
    %108 = vector.extract_strided_slice %94 {offsets = [13, 33], sizes = [1, 256], strides = [1, 1]} : vector<36x384xf32> to vector<1x256xf32>
    %109 = vector.extract_strided_slice %94 {offsets = [14, 34], sizes = [1, 256], strides = [1, 1]} : vector<36x384xf32> to vector<1x256xf32>
    %110 = vector.extract_strided_slice %94 {offsets = [15, 35], sizes = [1, 256], strides = [1, 1]} : vector<36x384xf32> to vector<1x256xf32>
    %111 = vector.extract_strided_slice %94 {offsets = [16, 36], sizes = [1, 256], strides = [1, 1]} : vector<36x384xf32> to vector<1x256xf32>
    %112 = vector.extract_strided_slice %94 {offsets = [17, 37], sizes = [1, 256], strides = [1, 1]} : vector<36x384xf32> to vector<1x256xf32>
    %113 = vector.extract_strided_slice %94 {offsets = [18, 48], sizes = [1, 256], strides = [1, 1]} : vector<36x384xf32> to vector<1x256xf32>
    %114 = vector.extract_strided_slice %94 {offsets = [19, 49], sizes = [1, 256], strides = [1, 1]} : vector<36x384xf32> to vector<1x256xf32>
    %115 = vector.extract_strided_slice %94 {offsets = [20, 50], sizes = [1, 256], strides = [1, 1]} : vector<36x384xf32> to vector<1x256xf32>
    %116 = vector.extract_strided_slice %94 {offsets = [21, 51], sizes = [1, 256], strides = [1, 1]} : vector<36x384xf32> to vector<1x256xf32>
    %117 = vector.extract_strided_slice %94 {offsets = [22, 52], sizes = [1, 256], strides = [1, 1]} : vector<36x384xf32> to vector<1x256xf32>
    %118 = vector.extract_strided_slice %94 {offsets = [23, 53], sizes = [1, 256], strides = [1, 1]} : vector<36x384xf32> to vector<1x256xf32>
    %119 = vector.extract_strided_slice %94 {offsets = [24, 64], sizes = [1, 256], strides = [1, 1]} : vector<36x384xf32> to vector<1x256xf32>
    %120 = vector.extract_strided_slice %94 {offsets = [25, 65], sizes = [1, 256], strides = [1, 1]} : vector<36x384xf32> to vector<1x256xf32>
    %121 = vector.extract_strided_slice %94 {offsets = [26, 66], sizes = [1, 256], strides = [1, 1]} : vector<36x384xf32> to vector<1x256xf32>
    %122 = vector.extract_strided_slice %94 {offsets = [27, 67], sizes = [1, 256], strides = [1, 1]} : vector<36x384xf32> to vector<1x256xf32>
    %123 = vector.extract_strided_slice %94 {offsets = [28, 68], sizes = [1, 256], strides = [1, 1]} : vector<36x384xf32> to vector<1x256xf32>
    %124 = vector.extract_strided_slice %94 {offsets = [29, 69], sizes = [1, 256], strides = [1, 1]} : vector<36x384xf32> to vector<1x256xf32>
    %125 = vector.extract_strided_slice %94 {offsets = [30, 80], sizes = [1, 256], strides = [1, 1]} : vector<36x384xf32> to vector<1x256xf32>
    %126 = vector.extract_strided_slice %94 {offsets = [31, 81], sizes = [1, 256], strides = [1, 1]} : vector<36x384xf32> to vector<1x256xf32>
    %127 = vector.extract_strided_slice %94 {offsets = [32, 82], sizes = [1, 256], strides = [1, 1]} : vector<36x384xf32> to vector<1x256xf32>
    %128 = vector.extract_strided_slice %94 {offsets = [33, 83], sizes = [1, 256], strides = [1, 1]} : vector<36x384xf32> to vector<1x256xf32>
    %129 = vector.extract_strided_slice %94 {offsets = [34, 84], sizes = [1, 256], strides = [1, 1]} : vector<36x384xf32> to vector<1x256xf32>
    %130 = vector.extract_strided_slice %94 {offsets = [35, 85], sizes = [1, 256], strides = [1, 1]} : vector<36x384xf32> to vector<1x256xf32>
    %131 = arith.addf %95, %96 : vector<1x256xf32>
    %132 = arith.addf %97, %98 : vector<1x256xf32>
    %133 = arith.addf %99, %100 : vector<1x256xf32>
    %134 = arith.addf %101, %102 : vector<1x256xf32>
    %135 = arith.addf %103, %104 : vector<1x256xf32>
    %136 = arith.addf %105, %106 : vector<1x256xf32>
    %137 = arith.addf %107, %108 : vector<1x256xf32>
    %138 = arith.addf %109, %110 : vector<1x256xf32>
    %139 = arith.addf %111, %112 : vector<1x256xf32>
    %140 = arith.addf %113, %114 : vector<1x256xf32>
    %141 = arith.addf %115, %116 : vector<1x256xf32>
    %142 = arith.addf %117, %118 : vector<1x256xf32>
    %143 = arith.addf %119, %120 : vector<1x256xf32>
    %144 = arith.addf %121, %122 : vector<1x256xf32>
    %145 = arith.addf %123, %124 : vector<1x256xf32>
    %146 = arith.addf %125, %126 : vector<1x256xf32>
    %147 = arith.addf %127, %128 : vector<1x256xf32>
    %148 = arith.addf %129, %130 : vector<1x256xf32>
    %149 = arith.addf %131, %132 : vector<1x256xf32>
    %150 = arith.addf %133, %134 : vector<1x256xf32>
    %151 = arith.addf %135, %136 : vector<1x256xf32>
    %152 = arith.addf %137, %138 : vector<1x256xf32>
    %153 = arith.addf %139, %140 : vector<1x256xf32>
    %154 = arith.addf %141, %142 : vector<1x256xf32>
    %155 = arith.addf %143, %144 : vector<1x256xf32>
    %156 = arith.addf %145, %146 : vector<1x256xf32>
    %157 = arith.addf %147, %148 : vector<1x256xf32>
    %158 = arith.addf %149, %150 : vector<1x256xf32>
    %159 = arith.addf %151, %152 : vector<1x256xf32>
    %160 = arith.addf %153, %154 : vector<1x256xf32>
    %161 = arith.addf %155, %156 : vector<1x256xf32>
    %162 = arith.addf %158, %159 : vector<1x256xf32>
    %163 = arith.addf %160, %161 : vector<1x256xf32>
    %164 = arith.addf %162, %163 : vector<1x256xf32>
    %165 = arith.addf %164, %157 : vector<1x256xf32>
    %cst_13 = arith.constant 1.000000e-01 : f32
    %166 = vector.broadcast %cst_13 : f32 to vector<1x256xf32>
    %167 = arith.mulf %166, %165 : vector<1x256xf32>
    %168 = arith.index_cast %c1_i32 : i32 to index
    %c0_14 = arith.constant 0 : index
    %c0_15 = arith.constant 0 : index
    %169 = vector.load %arg3[%168, %c0_14, %c0_15] : memref<2x1x256xf32, #tpu.memory_space<vmem>>, vector<1x1x256xf32>
    %170 = vector.shape_cast %169 : vector<1x1x256xf32> to vector<1x256xf32>
    %171 = vector.shape_cast %167 : vector<1x256xf32> to vector<1x1x256xf32>
    tpu.vector_store %arg3[%168, %c0_14, %c0_15], %171 {strides = array<i32>} : memref<2x1x256xf32, #tpu.memory_space<vmem>>, vector<1x1x256xf32>,
    %c2_i32 = arith.constant 2 : i32
    return
  }
  func.func @transform_0(%arg0: i32) -> (i32, i32, i32) {
    %c0_i32 = arith.constant 0 : i32
    %c0_i32_0 = arith.constant 0 : i32
    %c0_i32_1 = arith.constant 0 : i32
    return %arg0, %c0_i32, %c0_i32_0 : i32, i32, i32
  }
  func.func @transform_1(%arg0: i32) -> (i32, i32, i32) {
    %c0_i32 = arith.constant 0 : i32
    %c0_i32_0 = arith.constant 0 : i32
    %c0_i32_1 = arith.constant 0 : i32
    return %arg0, %c0_i32, %c0_i32_0 : i32, i32, i32
  }
  func.func @transform_2(%arg0: i32) -> (i32, i32, i32) {
    %c0_i32 = arith.constant 0 : i32
    %c0_i32_0 = arith.constant 0 : i32
    %c0_i32_1 = arith.constant 0 : i32
    return %arg0, %c0_i32, %c0_i32_0 : i32, i32, i32
  }
}

</mosaic_0001>

<llo_original>
// kernel: tpu_custom_call.1
$region0: #{tpu_custom_call.1}
  #allocation0 [shape = 'u32[]', space=smem, size = 0x4, offset = 0x4, fixed_abs, tag = 'smem constant byte address 0x4 - core index']
  #allocation1 [shape = 'u32[144,128]{1,0:T(1,128)}', space=vmem, size = 0x12000, scoped, tag = 'internal scratch']
  %s0 = inlined_call_operand.vmem [shape: f32[2,4,256], index: 0, kind: input, shape index: {}]
  %s1 = inlined_call_operand.vmem [shape: f32[2,36,4], index: 1, kind: input, shape index: {}]
  %s2 = inlined_call_operand.hbm [shape: f32[2,1,256], index: 2, kind: output, shape index: {}]
  %s3 = sld [smem:[#allocation0]]
  $region18: #{tpu_custom_call.1} parent=0
    _
  %s5 = ssub.s32 1, %s3
  %s6 = scalar_select 0, %s5, %s3
  $region1: #{tpu_custom_call.1} parent=0
    #allocation2 [shape = 'u8[2048]{0}', space=vmem, size = 0x800, scoped, tag = 'output window, operand 0, single buffered']
    #allocation3 [shape = 's32[1]{0}', space=sflag, size = 0x4, scoped, tag = 'scoped memory for tpu_custom_call.1']
    %7 = vsyncpa [#allocation3], 0
    // Predicated region
    $region2: #{tpu_custom_call.1} parent=1 // pred_check
      _
    $region3: #{tpu_custom_call.1} parent=1 // pred_check_branch
      %9 = sbr.rel (0) target = $region5
    $region4: #{tpu_custom_call.1} parent=1 // pred_region
      _
    $region5: #{tpu_custom_call.1} parent=1 // pred_fallthru
      _
    // Predicated region
    $region6: #{tpu_custom_call.1} parent=1 // pred_check
      _
    $region7: #{tpu_custom_call.1} parent=1 // pred_check_branch
      %11 = sbr.rel (0) target = $region9
    $region8: #{tpu_custom_call.1} parent=1 // pred_region
      _
    $region9: #{tpu_custom_call.1} parent=1 // pred_fallthru
      _
    %v12 = vld [vmem:[%s1] sm:$0xff]
    %v13 = vld [vmem:[%s1 + $0x8] sm:$0xff]
    %v14 = vld [vmem:[%s1 + $0x10] sm:$0xff]
    %v15 = vld [vmem:[%s1 + $0x18] sm:$0xff]
    %v16 = vld [vmem:[%s1 + $0x20] sm:$0xf]
    %v17 = vld [vmem:[%s0] sm:$0xff]
    %v19 = vcombine.high %v17, %v17
    %vm20 = vcmask 31744
    %v22 = vsel %vm20, %v12, 0
    %v25 = vsel %vm20, %v13, 0
    %v28 = vsel %vm20, %v14, 0
    %v31 = vsel %vm20, %v15, 0
    %v34 = vsel %vm20, %v16, 0
    %vm36 = vcmask 1043456
    %v37 = vsel %vm36, %v17, 0
    %v39 = vsel %vm36, %v19, 0
    %41 = vmatprep.subr.mxu0 0.0
    %42 = vmatpush1.msra.mxu0 0.0
    %43 = vmatprep.subr.mxu0 0.0
    %44 = vmatpush1.msra.mxu0 0.0
    %45 = vmatprep.subr.mxu0 0.0
    %46 = vmatpush1.msra.mxu0 0.0
    %47 = vmatprep.subr.mxu0 0.0
    %48 = vmatpush1.msra.mxu0 0.0
    %49 = vmatprep.subr.mxu0 0.0
    %50 = vmatpush1.msra.mxu0 0.0
    %51 = vmatprep.subr.mxu0 0.0
    %52 = vmatpush1.msra.mxu0 0.0
    %53 = vmatprep.subr.mxu0 0.0
    %54 = vmatpush1.msra.mxu0 0.0
    %55 = vmatprep.subr.mxu0 0.0
    %56 = vmatpush1.msra.mxu0 0.0
    %57 = vmatprep.subr.mxu0 0.0
    %58 = vmatpush1.msra.mxu0 0.0
    %59 = vmatprep.subr.mxu0 0.0
    %60 = vmatpush1.msra.mxu0 0.0
    %61 = vmatprep.subr.mxu0 0.0
    %62 = vmatpush1.msra.mxu0 0.0
    %63 = vmatprep.subr.mxu0 0.0
    %64 = vmatpush1.msra.mxu0 0.0
    %65 = vmatprep.subr.mxu0 0.0
    %66 = vmatpush1.msra.mxu0 0.0
    %67 = vmatprep.subr.mxu0 0.0
    %68 = vmatpush1.msra.mxu0 0.0
    %69 = vmatprep.subr.mxu0 0.0
    %70 = vmatpush1.msra.mxu0 0.0
    %71 = vmatprep.subr.mxu0 %v39
    %72 = vmatpush1.msra.mxu0 %v37
    %73 = vmatprep.subr.mxu0 0.0
    %74 = vmatpush2.msra.mxu0 0.0
    %75 = vmatprep.subr.mxu0 0.0
    %76 = vmatpush2.msra.mxu0 0.0
    %77 = vmatprep.subr.mxu0 0.0
    %78 = vmatpush2.msra.mxu0 0.0
    %79 = vmatprep.subr.mxu0 0.0
    %80 = vmatpush2.msra.mxu0 0.0
    %81 = vmatprep.subr.mxu0 0.0
    %82 = vmatpush2.msra.mxu0 0.0
    %83 = vmatprep.subr.mxu0 0.0
    %84 = vmatpush2.msra.mxu0 0.0
    %85 = vmatprep.subr.mxu0 0.0
    %86 = vmatpush2.msra.mxu0 0.0
    %87 = vmatprep.subr.mxu0 0.0
    %88 = vmatpush2.msra.mxu0 0.0
    %89 = vmatprep.subr.mxu0 0.0
    %90 = vmatpush2.msra.mxu0 0.0
    %91 = vmatprep.subr.mxu0 0.0
    %92 = vmatpush2.msra.mxu0 0.0
    %93 = vmatprep.subr.mxu0 0.0
    %94 = vmatpush2.msra.mxu0 0.0
    %95 = vmatprep.subr.mxu0 0.0
    %96 = vmatpush2.msra.mxu0 0.0
    %97 = vmatprep.subr.mxu0 0.0
    %98 = vmatpush2.msra.mxu0 0.0
    %99 = vmatprep.subr.mxu0 0.0
    %100 = vmatpush2.msra.mxu0 0.0
    %101 = vmatprep.subr.mxu0 0.0
    %102 = vmatpush2.msra.mxu0 0.0
    %103 = vmatprep.subr.mxu0 0.0
    %104 = vmatpush2.msra.mxu0 0.0
    %105 = vmatprep.mubr.f32.mxu0 0.0
    %106 = vmatmul.mubr.f32.gmra.mxu0 %v22
    %v107 = vpop.f32.mrf.mxu0
    %v108 = vadd.f32 0.0, %v107
    %v109 = vpop.f32.mrf.mxu0
    %v110 = vadd.f32 0.0, %v109
    %111 = vmatprep.mubr.f32.mxu0 0.0
    %112 = vmatmul.mubr.f32.gmra.mxu0 %v25
    %v113 = vpop.f32.mrf.mxu0
    %v114 = vadd.f32 0.0, %v113
    %v115 = vpop.f32.mrf.mxu0
    %v116 = vadd.f32 0.0, %v115
    %117 = vmatprep.mubr.f32.mxu0 0.0
    %118 = vmatmul.mubr.f32.gmra.mxu0 %v28
    %v119 = vpop.f32.mrf.mxu0
    %v120 = vadd.f32 0.0, %v119
    %v121 = vpop.f32.mrf.mxu0
    %v122 = vadd.f32 0.0, %v121
    %123 = vmatprep.mubr.f32.mxu0 0.0
    %124 = vmatmul.mubr.f32.gmra.mxu0 %v31
    %v125 = vpop.f32.mrf.mxu0
    %v126 = vadd.f32 0.0, %v125
    %v127 = vpop.f32.mrf.mxu0
    %v128 = vadd.f32 0.0, %v127
    %129 = vmatprep.mubr.f32.mxu0 0.0
    %130 = vmatmul.mubr.f32.gmra.mxu0 %v34
    %v131 = vpop.f32.mrf.mxu0
    %v132 = vadd.f32 0.0, %v131
    %v133 = vpop.f32.mrf.mxu0
    %v134 = vadd.f32 0.0, %v133
    %135 = vdwg.mxu0
    %v139 = vrot.slane %v108, 1
    %v140 = vrot.slane %v110, 1
    %v141 = vrot.slane 0.0, 1
    %142 = vrot.lane.b32.xlu0 %v139, 127
    %v143 = vpop.permute.xlu0 %142
    %144 = vrot.lane.b32.xlu0 %v140, 127
    %v145 = vpop.permute.xlu0 %144
    %146 = vrot.lane.b32.xlu0 %v141, 127
    %v147 = vpop.permute.xlu0 %146
    %vm148 = vcmask 1039360
    %v149 = vsel %vm148, %v143, %v145
    %v150 = vsel %vm148, %v145, %v147
    %v153 = vadd.f32 %v108, %v149
    %v154 = vadd.f32 %v110, %v150
    %v156 = vadd.f32 %v147, 0.0
    %v159 = vrot.slane %v114, 1
    %v160 = vrot.slane %v116, 1
    %161 = vrot.lane.b32.xlu0 %v159, 127
    %v162 = vpop.permute.xlu0 %161
    %163 = vrot.lane.b32.xlu0 %v160, 127
    %v164 = vpop.permute.xlu0 %163
    %v165 = vsel %vm148, %v162, %v164
    %v166 = vsel %vm148, %v164, %v147
    %v169 = vadd.f32 %v114, %v165
    %v170 = vadd.f32 %v116, %v166
    %v173 = vrot.slane %v120, 1
    %v174 = vrot.slane %v122, 1
    %175 = vrot.lane.b32.xlu0 %v173, 127
    %v176 = vpop.permute.xlu0 %175
    %177 = vrot.lane.b32.xlu0 %v174, 127
    %v178 = vpop.permute.xlu0 %177
    %v179 = vsel %vm148, %v176, %v178
    %v180 = vsel %vm148, %v178, %v147
    %v183 = vadd.f32 %v120, %v179
    %v184 = vadd.f32 %v122, %v180
    %v187 = vrot.slane %v126, 1
    %v188 = vrot.slane %v128, 1
    %189 = vrot.lane.b32.xlu0 %v187, 127
    %v190 = vpop.permute.xlu0 %189
    %191 = vrot.lane.b32.xlu0 %v188, 127
    %v192 = vpop.permute.xlu0 %191
    %v193 = vsel %vm148, %v190, %v192
    %v194 = vsel %vm148, %v192, %v147
    %v197 = vadd.f32 %v126, %v193
    %v198 = vadd.f32 %v128, %v194
    %v201 = vrot.slane %v132, 1
    %v202 = vrot.slane %v134, 1
    %203 = vrot.lane.b32.xlu0 %v201, 127
    %v204 = vpop.permute.xlu0 %203
    %205 = vrot.lane.b32.xlu0 %v202, 127
    %v206 = vpop.permute.xlu0 %205
    %v207 = vsel %vm148, %v204, %v206
    %v208 = vsel %vm148, %v206, %v147
    %v211 = vadd.f32 %v132, %v207
    %v212 = vadd.f32 %v134, %v208
    %v216 = vrot.slane %v153, 2
    %v217 = vrot.slane %v154, 2
    %v218 = vrot.slane %v156, 2
    %219 = vrot.lane.b32.xlu0 %v216, 126
    %v220 = vpop.permute.xlu0 %219
    %221 = vrot.lane.b32.xlu0 %v217, 126
    %v222 = vpop.permute.xlu0 %221
    %223 = vrot.lane.b32.xlu0 %v218, 126
    %v224 = vpop.permute.xlu0 %223
    %vm225 = vcmask 1031168
    %v226 = vsel %vm225, %v220, %v222
    %v227 = vsel %vm225, %v222, %v224
    %v230 = vadd.f32 %v153, %v226
    %v231 = vadd.f32 %v154, %v227
    %232 = vrot.lane.b32.xlu0 %v216, 116
    %v233 = vpop.permute.xlu0 %232
    %234 = vrot.lane.b32.xlu0 %v217, 116
    %v235 = vpop.permute.xlu0 %234
    %236 = vrot.lane.b32.xlu0 %v218, 116
    %v237 = vpop.permute.xlu0 %236
    %vm238 = vcmask 949248
    %v239 = vsel %vm238, %v233, %v235
    %v240 = vsel %vm238, %v235, %v237
    %v244 = vadd.f32 %v153, %v239
    %v245 = vadd.f32 %v154, %v240
    %v246 = vadd.f32 %v156, %v237
    %v249 = vrot.slane %v169, 2
    %v250 = vrot.slane %v170, 2
    %251 = vrot.lane.b32.xlu0 %v249, 126
    %v252 = vpop.permute.xlu0 %251
    %253 = vrot.lane.b32.xlu0 %v250, 126
    %v254 = vpop.permute.xlu0 %253
    %v255 = vsel %vm225, %v252, %v254
    %v256 = vsel %vm225, %v254, %v224
    %v260 = vadd.f32 %v169, %v255
    %v261 = vadd.f32 %v170, %v256
    %v262 = vadd.f32 %v156, %v224
    %v265 = vrot.slane %v183, 2
    %v266 = vrot.slane %v184, 2
    %267 = vrot.lane.b32.xlu0 %v265, 116
    %v268 = vpop.permute.xlu0 %267
    %269 = vrot.lane.b32.xlu0 %v266, 116
    %v270 = vpop.permute.xlu0 %269
    %v271 = vsel %vm238, %v268, %v270
    %v272 = vsel %vm238, %v270, %v237
    %v275 = vadd.f32 %v183, %v271
    %v276 = vadd.f32 %v184, %v272
    %277 = vrot.lane.b32.xlu0 %v265, 126
    %v278 = vpop.permute.xlu0 %277
    %279 = vrot.lane.b32.xlu0 %v266, 126
    %v280 = vpop.permute.xlu0 %279
    %v281 = vsel %vm225, %v278, %v280
    %v282 = vsel %vm225, %v280, %v224
    %v285 = vadd.f32 %v183, %v281
    %v286 = vadd.f32 %v184, %v282
    %v289 = vrot.slane %v197, 2
    %v290 = vrot.slane %v198, 2
    %291 = vrot.lane.b32.xlu0 %v289, 126
    %v292 = vpop.permute.xlu0 %291
    %293 = vrot.lane.b32.xlu0 %v290, 126
    %v294 = vpop.permute.xlu0 %293
    %v295 = vsel %vm225, %v292, %v294
    %v296 = vsel %vm225, %v294, %v224
    %v299 = vadd.f32 %v197, %v295
    %v300 = vadd.f32 %v198, %v296
    %301 = vrot.lane.b32.xlu0 %v289, 116
    %v302 = vpop.permute.xlu0 %301
    %303 = vrot.lane.b32.xlu0 %v290, 116
    %v304 = vpop.permute.xlu0 %303
    %v305 = vsel %vm238, %v302, %v304
    %v306 = vsel %vm238, %v304, %v237
    %v309 = vadd.f32 %v197, %v305
    %v310 = vadd.f32 %v198, %v306
    %v313 = vrot.slane %v211, 2
    %v314 = vrot.slane %v212, 2
    %315 = vrot.lane.b32.xlu0 %v313, 126
    %v316 = vpop.permute.xlu0 %315
    %317 = vrot.lane.b32.xlu0 %v314, 126
    %v318 = vpop.permute.xlu0 %317
    %v319 = vsel %vm225, %v316, %v318
    %v320 = vsel %vm225, %v318, %v224
    %v323 = vadd.f32 %v211, %v319
    %v324 = vadd.f32 %v212, %v320
    %v328 = vrot.slane %v244, 4
    %v329 = vrot.slane %v245, 4
    %v330 = vrot.slane %v246, 4
    %331 = vrot.lane.b32.xlu0 %v328, 124
    %v332 = vpop.permute.xlu0 %331
    %333 = vrot.lane.b32.xlu0 %v329, 124
    %v334 = vpop.permute.xlu0 %333
    %335 = vrot.lane.b32.xlu0 %v330, 124
    %v336 = vpop.permute.xlu0 %335
    %vm337 = vcmask 1014784
    %v338 = vsel %vm337, %v332, %v334
    %v339 = vsel %vm337, %v334, %v336
    %v342 = vadd.f32 %v230, %v338
    %v343 = vadd.f32 %v231, %v339
    %v347 = vrot.slane %v260, 4
    %v348 = vrot.slane %v261, 4
    %v349 = vrot.slane %v262, 4
    %350 = vrot.lane.b32.xlu0 %v347, 114
    %v351 = vpop.permute.xlu0 %350
    %352 = vrot.lane.b32.xlu0 %v348, 114
    %v353 = vpop.permute.xlu0 %352
    %354 = vrot.lane.b32.xlu0 %v349, 114
    %v355 = vpop.permute.xlu0 %354
    %vm356 = vcmask 932864
    %v357 = vsel %vm356, %v351, %v353
    %v358 = vsel %vm356, %v353, %v355
    %v362 = vadd.f32 %v260, %v357
    %v363 = vadd.f32 %v261, %v358
    %v364 = vadd.f32 %v262, %v355
    %v367 = vrot.slane %v285, 4
    %v368 = vrot.slane %v286, 4
    %369 = vrot.lane.b32.xlu0 %v367, 114
    %v370 = vpop.permute.xlu0 %369
    %371 = vrot.lane.b32.xlu0 %v368, 114
    %v372 = vpop.permute.xlu0 %371
    %v373 = vsel %vm356, %v370, %v372
    %v374 = vsel %vm356, %v372, %v355
    %v377 = vadd.f32 %v275, %v373
    %v378 = vadd.f32 %v276, %v374
    %v379 = vadd.f32 %v246, %v355
    %v382 = vrot.slane %v309, 4
    %v383 = vrot.slane %v310, 4
    %384 = vrot.lane.b32.xlu0 %v382, 124
    %v385 = vpop.permute.xlu0 %384
    %386 = vrot.lane.b32.xlu0 %v383, 124
    %v387 = vpop.permute.xlu0 %386
    %v388 = vsel %vm337, %v385, %v387
    %v389 = vsel %vm337, %v387, %v336
    %v393 = vadd.f32 %v299, %v388
    %v394 = vadd.f32 %v300, %v389
    %v395 = vadd.f32 %v262, %v336
    %399 = vrot.lane.b32.xlu0 %v362, 110
    %v400 = vpop.permute.xlu0 %399
    %401 = vrot.lane.b32.xlu0 %v363, 110
    %v402 = vpop.permute.xlu0 %401
    %403 = vrot.lane.b32.xlu0 %v364, 110
    %v404 = vpop.permute.xlu0 %403
    %vm405 = vcmask 900096
    %v406 = vsel %vm405, %v400, %v402
    %v407 = vsel %vm405, %v402, %v404
    %v410 = vadd.f32 %v342, %v406
    %v411 = vadd.f32 %v343, %v407
    %415 = vrot.lane.b32.xlu0 %v393, 100
    %v416 = vpop.permute.xlu0 %415
    %417 = vrot.lane.b32.xlu0 %v394, 100
    %v418 = vpop.permute.xlu0 %417
    %419 = vrot.lane.b32.xlu0 %v395, 100
    %v420 = vpop.permute.xlu0 %419
    %vm421 = vcmask 818176
    %v422 = vsel %vm421, %v416, %v418
    %v423 = vsel %vm421, %v418, %v420
    %v427 = vadd.f32 %v377, %v422
    %v428 = vadd.f32 %v378, %v423
    %v429 = vadd.f32 %v379, %v420
    %433 = vrot.lane.b32.xlu0 %v427, 92
    %v434 = vpop.permute.xlu0 %433
    %435 = vrot.lane.b32.xlu0 %v428, 92
    %v436 = vpop.permute.xlu0 %435
    %437 = vrot.lane.b32.xlu0 %v429, 92
    %v438 = vpop.permute.xlu0 %437
    %vm439 = vcmask 752640
    %v440 = vsel %vm439, %v434, %v436
    %v441 = vsel %vm439, %v436, %v438
    %v444 = vadd.f32 %v410, %v440
    %v445 = vadd.f32 %v411, %v441
    %448 = vrot.lane.b32.xlu0 %v323, 46
    %v449 = vpop.permute.xlu0 %448
    %450 = vrot.lane.b32.xlu0 %v324, 46
    %v451 = vpop.permute.xlu0 %450
    %452 = vrot.lane.b32.xlu0 %v262, 46
    %v453 = vpop.permute.xlu0 %452
    %vm454 = vcmask 375808
    %v455 = vsel %vm454, %v449, %v451
    %v456 = vsel %vm454, %v451, %v453
    %v459 = vadd.f32 %v444, %v455
    %v460 = vadd.f32 %v445, %v456
    %v461 = vmul.f32 %v459, 0.1
    %v462 = vmul.f32 %v460, 0.1
    %v465 = vcombine.low %v461, %v462
    %v467 = vunpack.c.l.s4 1966171168
    %v468 = vunpack.c.0.s8 %v467
    %v469 = vlaneseq
    %v470 = vshrl.u32 %v469, 7
    %v471 = vsub.s32 %v468, %v470
    %v472 = vrot.slane %v465, %v471
    %v474 = vunpack.c.l.s4 1966171168
    %v475 = vunpack.c.0.s8 %v474
    %v476 = vlaneseq
    %v477 = vshrl.u32 %v476, 7
    %v478 = vsub.s32 %v475, %v477
    %v479 = vrot.slane %v472, %v478
    %v481 = vlaneseq
    %vm482 = vcmp.ge.s32.totalorder %v481, 0
    %vm483 = vcmp.lt.s32.totalorder %v481, 256
    %vm484 = vmand %vm482, %vm483
    %485 = vst.msk [vmem:[#allocation2] sm:$0x3] %vm484, %v479
    %s486 = scalar_lea.vmem %s1, 40
    %v487 = vld [vmem:[%s486] sm:$0xff]
    %v488 = vld [vmem:[%s486 + $0x8] sm:$0xff]
    %v489 = vld [vmem:[%s486 + $0x10] sm:$0xff]
    %v490 = vld [vmem:[%s486 + $0x18] sm:$0xff]
    %v491 = vld [vmem:[%s486 + $0x20] sm:$0xf]
    %s492 = scalar_lea.vmem %s0, 8
    %v493 = vld [vmem:[%s492] sm:$0xff]
    %v495 = vcombine.high %v493, %v493
    %v497 = vsel %vm20, %v487, 0
    %v500 = vsel %vm20, %v488, 0
    %v503 = vsel %vm20, %v489, 0
    %v506 = vsel %vm20, %v490, 0
    %v509 = vsel %vm20, %v491, 0
    %v511 = vsel %vm36, %v493, 0
    %v513 = vsel %vm36, %v495, 0
    %515 = vmatprep.subr.mxu0 0.0
    %516 = vmatpush1.msra.mxu0 0.0
    %517 = vmatprep.subr.mxu0 0.0
    %518 = vmatpush1.msra.mxu0 0.0
    %519 = vmatprep.subr.mxu0 0.0
    %520 = vmatpush1.msra.mxu0 0.0
    %521 = vmatprep.subr.mxu0 0.0
    %522 = vmatpush1.msra.mxu0 0.0
    %523 = vmatprep.subr.mxu0 0.0
    %524 = vmatpush1.msra.mxu0 0.0
    %525 = vmatprep.subr.mxu0 0.0
    %526 = vmatpush1.msra.mxu0 0.0
    %527 = vmatprep.subr.mxu0 0.0
    %528 = vmatpush1.msra.mxu0 0.0
    %529 = vmatprep.subr.mxu0 0.0
    %530 = vmatpush1.msra.mxu0 0.0
    %531 = vmatprep.subr.mxu0 0.0
    %532 = vmatpush1.msra.mxu0 0.0
    %533 = vmatprep.subr.mxu0 0.0
    %534 = vmatpush1.msra.mxu0 0.0
    %535 = vmatprep.subr.mxu0 0.0
    %536 = vmatpush1.msra.mxu0 0.0
    %537 = vmatprep.subr.mxu0 0.0
    %538 = vmatpush1.msra.mxu0 0.0
    %539 = vmatprep.subr.mxu0 0.0
    %540 = vmatpush1.msra.mxu0 0.0
    %541 = vmatprep.subr.mxu0 0.0
    %542 = vmatpush1.msra.mxu0 0.0
    %543 = vmatprep.subr.mxu0 0.0
    %544 = vmatpush1.msra.mxu0 0.0
    %545 = vmatprep.subr.mxu0 %v513
    %546 = vmatpush1.msra.mxu0 %v511
    %547 = vmatprep.subr.mxu0 0.0
    %548 = vmatpush2.msra.mxu0 0.0
    %549 = vmatprep.subr.mxu0 0.0
    %550 = vmatpush2.msra.mxu0 0.0
    %551 = vmatprep.subr.mxu0 0.0
    %552 = vmatpush2.msra.mxu0 0.0
    %553 = vmatprep.subr.mxu0 0.0
    %554 = vmatpush2.msra.mxu0 0.0
    %555 = vmatprep.subr.mxu0 0.0
    %556 = vmatpush2.msra.mxu0 0.0
    %557 = vmatprep.subr.mxu0 0.0
    %558 = vmatpush2.msra.mxu0 0.0
    %559 = vmatprep.subr.mxu0 0.0
    %560 = vmatpush2.msra.mxu0 0.0
    %561 = vmatprep.subr.mxu0 0.0
    %562 = vmatpush2.msra.mxu0 0.0
    %563 = vmatprep.subr.mxu0 0.0
    %564 = vmatpush2.msra.mxu0 0.0
    %565 = vmatprep.subr.mxu0 0.0
    %566 = vmatpush2.msra.mxu0 0.0
    %567 = vmatprep.subr.mxu0 0.0
    %568 = vmatpush2.msra.mxu0 0.0
    %569 = vmatprep.subr.mxu0 0.0
    %570 = vmatpush2.msra.mxu0 0.0
    %571 = vmatprep.subr.mxu0 0.0
    %572 = vmatpush2.msra.mxu0 0.0
    %573 = vmatprep.subr.mxu0 0.0
    %574 = vmatpush2.msra.mxu0 0.0
    %575 = vmatprep.subr.mxu0 0.0
    %576 = vmatpush2.msra.mxu0 0.0
    %577 = vmatprep.subr.mxu0 0.0
    %578 = vmatpush2.msra.mxu0 0.0
    %579 = vmatprep.mubr.f32.mxu0 0.0
    %580 = vmatmul.mubr.f32.gmra.mxu0 %v497
    %v581 = vpop.f32.mrf.mxu0
    %v582 = vadd.f32 0.0, %v581
    %v583 = vpop.f32.mrf.mxu0
    %v584 = vadd.f32 0.0, %v583
    %585 = vmatprep.mubr.f32.mxu0 0.0
    %586 = vmatmul.mubr.f32.gmra.mxu0 %v500
    %v587 = vpop.f32.mrf.mxu0
    %v588 = vadd.f32 0.0, %v587
    %v589 = vpop.f32.mrf.mxu0
    %v590 = vadd.f32 0.0, %v589
    %591 = vmatprep.mubr.f32.mxu0 0.0
    %592 = vmatmul.mubr.f32.gmra.mxu0 %v503
    %v593 = vpop.f32.mrf.mxu0
    %v594 = vadd.f32 0.0, %v593
    %v595 = vpop.f32.mrf.mxu0
    %v596 = vadd.f32 0.0, %v595
    %597 = vmatprep.mubr.f32.mxu0 0.0
    %598 = vmatmul.mubr.f32.gmra.mxu0 %v506
    %v599 = vpop.f32.mrf.mxu0
    %v600 = vadd.f32 0.0, %v599
    %v601 = vpop.f32.mrf.mxu0
    %v602 = vadd.f32 0.0, %v601
    %603 = vmatprep.mubr.f32.mxu0 0.0
    %604 = vmatmul.mubr.f32.gmra.mxu0 %v509
    %v605 = vpop.f32.mrf.mxu0
    %v606 = vadd.f32 0.0, %v605
    %v607 = vpop.f32.mrf.mxu0
    %v608 = vadd.f32 0.0, %v607
    %609 = vdwg.mxu0
    %v612 = vrot.slane %v582, 1
    %v613 = vrot.slane %v584, 1
    %614 = vrot.lane.b32.xlu0 %v612, 127
    %v615 = vpop.permute.xlu0 %614
    %616 = vrot.lane.b32.xlu0 %v613, 127
    %v617 = vpop.permute.xlu0 %616
    %v618 = vsel %vm148, %v615, %v617
    %v619 = vsel %vm148, %v617, %v147
    %v622 = vadd.f32 %v582, %v618
    %v623 = vadd.f32 %v584, %v619
    %v626 = vrot.slane %v588, 1
    %v627 = vrot.slane %v590, 1
    %628 = vrot.lane.b32.xlu0 %v626, 127
    %v629 = vpop.permute.xlu0 %628
    %630 = vrot.lane.b32.xlu0 %v627, 127
    %v631 = vpop.permute.xlu0 %630
    %v632 = vsel %vm148, %v629, %v631
    %v633 = vsel %vm148, %v631, %v147
    %v636 = vadd.f32 %v588, %v632
    %v637 = vadd.f32 %v590, %v633
    %v640 = vrot.slane %v594, 1
    %v641 = vrot.slane %v596, 1
    %642 = vrot.lane.b32.xlu0 %v640, 127
    %v643 = vpop.permute.xlu0 %642
    %644 = vrot.lane.b32.xlu0 %v641, 127
    %v645 = vpop.permute.xlu0 %644
    %v646 = vsel %vm148, %v643, %v645
    %v647 = vsel %vm148, %v645, %v147
    %v650 = vadd.f32 %v594, %v646
    %v651 = vadd.f32 %v596, %v647
    %v654 = vrot.slane %v600, 1
    %v655 = vrot.slane %v602, 1
    %656 = vrot.lane.b32.xlu0 %v654, 127
    %v657 = vpop.permute.xlu0 %656
    %658 = vrot.lane.b32.xlu0 %v655, 127
    %v659 = vpop.permute.xlu0 %658
    %v660 = vsel %vm148, %v657, %v659
    %v661 = vsel %vm148, %v659, %v147
    %v664 = vadd.f32 %v600, %v660
    %v665 = vadd.f32 %v602, %v661
    %v668 = vrot.slane %v606, 1
    %v669 = vrot.slane %v608, 1
    %670 = vrot.lane.b32.xlu0 %v668, 127
    %v671 = vpop.permute.xlu0 %670
    %672 = vrot.lane.b32.xlu0 %v669, 127
    %v673 = vpop.permute.xlu0 %672
    %v674 = vsel %vm148, %v671, %v673
    %v675 = vsel %vm148, %v673, %v147
    %v678 = vadd.f32 %v606, %v674
    %v679 = vadd.f32 %v608, %v675
    %v682 = vrot.slane %v622, 2
    %v683 = vrot.slane %v623, 2
    %684 = vrot.lane.b32.xlu0 %v682, 126
    %v685 = vpop.permute.xlu0 %684
    %686 = vrot.lane.b32.xlu0 %v683, 126
    %v687 = vpop.permute.xlu0 %686
    %v688 = vsel %vm225, %v685, %v687
    %v689 = vsel %vm225, %v687, %v224
    %v692 = vadd.f32 %v622, %v688
    %v693 = vadd.f32 %v623, %v689
    %694 = vrot.lane.b32.xlu0 %v682, 116
    %v695 = vpop.permute.xlu0 %694
    %696 = vrot.lane.b32.xlu0 %v683, 116
    %v697 = vpop.permute.xlu0 %696
    %v698 = vsel %vm238, %v695, %v697
    %v699 = vsel %vm238, %v697, %v237
    %v702 = vadd.f32 %v622, %v698
    %v703 = vadd.f32 %v623, %v699
    %v706 = vrot.slane %v636, 2
    %v707 = vrot.slane %v637, 2
    %708 = vrot.lane.b32.xlu0 %v706, 126
    %v709 = vpop.permute.xlu0 %708
    %710 = vrot.lane.b32.xlu0 %v707, 126
    %v711 = vpop.permute.xlu0 %710
    %v712 = vsel %vm225, %v709, %v711
    %v713 = vsel %vm225, %v711, %v224
    %v716 = vadd.f32 %v636, %v712
    %v717 = vadd.f32 %v637, %v713
    %v720 = vrot.slane %v650, 2
    %v721 = vrot.slane %v651, 2
    %722 = vrot.lane.b32.xlu0 %v720, 116
    %v723 = vpop.permute.xlu0 %722
    %724 = vrot.lane.b32.xlu0 %v721, 116
    %v725 = vpop.permute.xlu0 %724
    %v726 = vsel %vm238, %v723, %v725
    %v727 = vsel %vm238, %v725, %v237
    %v730 = vadd.f32 %v650, %v726
    %v731 = vadd.f32 %v651, %v727
    %732 = vrot.lane.b32.xlu0 %v720, 126
    %v733 = vpop.permute.xlu0 %732
    %734 = vrot.lane.b32.xlu0 %v721, 126
    %v735 = vpop.permute.xlu0 %734
    %v736 = vsel %vm225, %v733, %v735
    %v737 = vsel %vm225, %v735, %v224
    %v740 = vadd.f32 %v650, %v736
    %v741 = vadd.f32 %v651, %v737
    %v744 = vrot.slane %v664, 2
    %v745 = vrot.slane %v665, 2
    %746 = vrot.lane.b32.xlu0 %v744, 126
    %v747 = vpop.permute.xlu0 %746
    %748 = vrot.lane.b32.xlu0 %v745, 126
    %v749 = vpop.permute.xlu0 %748
    %v750 = vsel %vm225, %v747, %v749
    %v751 = vsel %vm225, %v749, %v224
    %v754 = vadd.f32 %v664, %v750
    %v755 = vadd.f32 %v665, %v751
    %756 = vrot.lane.b32.xlu0 %v744, 116
    %v757 = vpop.permute.xlu0 %756
    %758 = vrot.lane.b32.xlu0 %v745, 116
    %v759 = vpop.permute.xlu0 %758
    %v760 = vsel %vm238, %v757, %v759
    %v761 = vsel %vm238, %v759, %v237
    %v764 = vadd.f32 %v664, %v760
    %v765 = vadd.f32 %v665, %v761
    %v768 = vrot.slane %v678, 2
    %v769 = vrot.slane %v679, 2
    %770 = vrot.lane.b32.xlu0 %v768, 126
    %v771 = vpop.permute.xlu0 %770
    %772 = vrot.lane.b32.xlu0 %v769, 126
    %v773 = vpop.permute.xlu0 %772
    %v774 = vsel %vm225, %v771, %v773
    %v775 = vsel %vm225, %v773, %v224
    %v778 = vadd.f32 %v678, %v774
    %v779 = vadd.f32 %v679, %v775
    %v782 = vrot.slane %v702, 4
    %v783 = vrot.slane %v703, 4
    %784 = vrot.lane.b32.xlu0 %v782, 124
    %v785 = vpop.permute.xlu0 %784
    %786 = vrot.lane.b32.xlu0 %v783, 124
    %v787 = vpop.permute.xlu0 %786
    %v788 = vsel %vm337, %v785, %v787
    %v789 = vsel %vm337, %v787, %v336
    %v792 = vadd.f32 %v692, %v788
    %v793 = vadd.f32 %v693, %v789
    %v796 = vrot.slane %v716, 4
    %v797 = vrot.slane %v717, 4
    %798 = vrot.lane.b32.xlu0 %v796, 114
    %v799 = vpop.permute.xlu0 %798
    %800 = vrot.lane.b32.xlu0 %v797, 114
    %v801 = vpop.permute.xlu0 %800
    %v802 = vsel %vm356, %v799, %v801
    %v803 = vsel %vm356, %v801, %v355
    %v806 = vadd.f32 %v716, %v802
    %v807 = vadd.f32 %v717, %v803
    %v810 = vrot.slane %v740, 4
    %v811 = vrot.slane %v741, 4
    %812 = vrot.lane.b32.xlu0 %v810, 114
    %v813 = vpop.permute.xlu0 %812
    %814 = vrot.lane.b32.xlu0 %v811, 114
    %v815 = vpop.permute.xlu0 %814
    %v816 = vsel %vm356, %v813, %v815
    %v817 = vsel %vm356, %v815, %v355
    %v820 = vadd.f32 %v730, %v816
    %v821 = vadd.f32 %v731, %v817
    %v824 = vrot.slane %v764, 4
    %v825 = vrot.slane %v765, 4
    %826 = vrot.lane.b32.xlu0 %v824, 124
    %v827 = vpop.permute.xlu0 %826
    %828 = vrot.lane.b32.xlu0 %v825, 124
    %v829 = vpop.permute.xlu0 %828
    %v830 = vsel %vm337, %v827, %v829
    %v831 = vsel %vm337, %v829, %v336
    %v834 = vadd.f32 %v754, %v830
    %v835 = vadd.f32 %v755, %v831
    %838 = vrot.lane.b32.xlu0 %v806, 110
    %v839 = vpop.permute.xlu0 %838
    %840 = vrot.lane.b32.xlu0 %v807, 110
    %v841 = vpop.permute.xlu0 %840
    %v842 = vsel %vm405, %v839, %v841
    %v843 = vsel %vm405, %v841, %v404
    %v846 = vadd.f32 %v792, %v842
    %v847 = vadd.f32 %v793, %v843
    %850 = vrot.lane.b32.xlu0 %v834, 100
    %v851 = vpop.permute.xlu0 %850
    %852 = vrot.lane.b32.xlu0 %v835, 100
    %v853 = vpop.permute.xlu0 %852
    %v854 = vsel %vm421, %v851, %v853
    %v855 = vsel %vm421, %v853, %v420
    %v858 = vadd.f32 %v820, %v854
    %v859 = vadd.f32 %v821, %v855
    %862 = vrot.lane.b32.xlu0 %v858, 92
    %v863 = vpop.permute.xlu0 %862
    %864 = vrot.lane.b32.xlu0 %v859, 92
    %v865 = vpop.permute.xlu0 %864
    %v866 = vsel %vm439, %v863, %v865
    %v867 = vsel %vm439, %v865, %v438
    %v870 = vadd.f32 %v846, %v866
    %v871 = vadd.f32 %v847, %v867
    %874 = vrot.lane.b32.xlu0 %v778, 46
    %v875 = vpop.permute.xlu0 %874
    %876 = vrot.lane.b32.xlu0 %v779, 46
    %v877 = vpop.permute.xlu0 %876
    %v878 = vsel %vm454, %v875, %v877
    %v879 = vsel %vm454, %v877, %v453
    %v882 = vadd.f32 %v870, %v878
    %v883 = vadd.f32 %v871, %v879
    %v884 = vmul.f32 %v882, 0.1
    %v885 = vmul.f32 %v883, 0.1
    %v888 = vcombine.low %v884, %v885
    %v890 = vunpack.c.l.s4 1966171168
    %v891 = vunpack.c.0.s8 %v890
    %v892 = vlaneseq
    %v893 = vshrl.u32 %v892, 7
    %v894 = vsub.s32 %v891, %v893
    %v895 = vrot.slane %v888, %v894
    %v897 = vunpack.c.l.s4 1966171168
    %v898 = vunpack.c.0.s8 %v897
    %v899 = vlaneseq
    %v900 = vshrl.u32 %v899, 7
    %v901 = vsub.s32 %v898, %v900
    %v902 = vrot.slane %v895, %v901
    %s904 = scalar_lea.vmem [#allocation2], 2
    %905 = vst.msk [vmem:[%s904] sm:$0x3] %vm484, %v902
    // Predicated region
    $region10: #{tpu_custom_call.1} parent=1 // pred_check
      _
    $region11: #{tpu_custom_call.1} parent=1 // pred_check_branch
      %907 = sbr.rel (0) target = $region13
    $region12: #{tpu_custom_call.1} parent=1 // pred_region
      %s909 = ssub.s32 64, 64
      %910 = vsyncadd [#allocation3], %s909
      %s911 = sshll.u32 [#allocation2], 4
      %s912 = int_to_ptr.vmem [resolvable:$true] %s911
      %917 = dma.vmem_to_hbm [thread:$0]  %s912, 64, %s2, [#allocation3], 32, 32, 2
    $region13: #{tpu_custom_call.1} parent=1 // pred_fallthru
      _
    // Predicated region
    $region14: #{tpu_custom_call.1} parent=1 // pred_check
      _
    $region15: #{tpu_custom_call.1} parent=1 // pred_check_branch
      %919 = sbr.rel (0) target = $region17
    $region16: #{tpu_custom_call.1} parent=1 // pred_region
      %920 = dma.done [#allocation3], 64
    $region17: #{tpu_custom_call.1} parent=1 // pred_fallthru
      _
    %921 = vsyncpa [#allocation3], 1

</llo_original>
